<compile_context>
chip_gen: v6e
topology: v6e:2x2x1
jax: 0.10.0
libtpu: 0.0.40
codegen_flags: <defaults>
</compile_context>

<pallas_src>
import functools

import jax
import jax.numpy as jnp
from jax.experimental import pallas as pl
from jax.experimental.pallas import tpu as pltpu

_MIB = 1024 * 1024


def _scale_shift_kernel(x_ref, o_ref, *, mean, inv_std):
    # mean / inv_std are Python floats baked in at trace time (no operands).
    x = x_ref[...].astype(jnp.float32)
    if mean != 0.0:
        x = x - mean
    if inv_std != 1.0:
        x = x * inv_std
    o_ref[...] = x.astype(o_ref.dtype)


def _round_up(v, m):
    return ((v + m - 1) // m) * m


def _vmem_capacity_bytes():
    """Physical VMEM bytes per TensorCore (robust across generations)."""
    try:
        cap = int(getattr(pltpu.get_tpu_info(), "vmem_capacity_bytes", 0))
        if cap > 0:
            return cap
    except Exception:
        pass
    try:
        kind = jax.devices()[0].device_kind.lower()
    except Exception:
        kind = ""
    if "v7" in kind:
        return 64 * _MIB
    if any(k in kind for k in ("v4", "v5", "v6")):
        return 128 * _MIB
    return 64 * _MIB  # unknown future part: assume the smaller VMEM


def _block_budget():
    """(combined in+out block bytes, vmem_limit_bytes), VMEM-capacity aware."""
    cap = _vmem_capacity_bytes()
    # Leave >= 16 MiB of physical VMEM for compiler scratch / neighbours and
    # never ask for more than 48 MiB of scoped VMEM.
    vmem_limit = min(max(cap - 16 * _MIB, 16 * _MIB), 48 * _MIB)
    # Double-buffered (2x) combined block must fit with margin under the limit.
    combined = max(2 * _MIB, min(16 * _MIB, vmem_limit // 3))
    return combined, vmem_limit


def _scale_shift_2d(x2d, *, mean, inv_std, out_dtype):
    """Elementwise (x - mean) * inv_std over a 2D view, row/column tiled."""
    R, C = x2d.shape
    combined_budget, vmem_limit = _block_budget()

    in_sz = x2d.dtype.itemsize
    out_sz = jnp.dtype(out_dtype).itemsize
    per_elem = in_sz + out_sz
    # Sublane packing multiple of the narrowest dtype touching the block.
    sub = max(8, 32 // min(in_sz, out_sz))

    # ---- Column tiling: keep one sublane-group of rows within the budget ----
    c_pad = _round_up(C, 128)
    if sub * c_pad * per_elem <= combined_budget:
        tile_cols = C                      # full-extent trailing dim
        col_pad = c_pad
        col_steps = 1
    else:
        tile_cols = max(128, (combined_budget // (sub * per_elem)) // 128 * 128)
        col_pad = tile_cols
        col_steps = pl.cdiv(C, tile_cols)

    # ---- Row tiling ----
    bytes_per_sub_rows = sub * col_pad * per_elem
    budget_rows = max(sub, (combined_budget // bytes_per_sub_rows) * sub)

    # Grid sizing: enough steps for v7x megacore balance / pipeline overlap,
    # but keep per-step blocks big enough to amortize ~0.35us/step overhead.
    total_bytes = _round_up(R, 8) * c_pad * per_elem
    if total_bytes >= 32 * _MIB:
        desired_steps = 8
    elif total_bytes >= 8 * _MIB:
        desired_steps = 4
    elif total_bytes >= 2 * _MIB:
        desired_steps = 2
    else:
        desired_steps = 1
    desired_row_steps = max(1, -(-desired_steps // col_steps))

    if R <= sub:
        tile_rows = R                      # full-extent second-minor dim
    else:
        balance_rows = _round_up(pl.cdiv(R, desired_row_steps), sub)
        tile_rows = max(sub, min(budget_rows, balance_rows))
        tile_rows = min(tile_rows, _round_up(R, sub))
    row_steps = pl.cdiv(R, tile_rows)

    grid = (row_steps, col_steps)
    kernel = functools.partial(_scale_shift_kernel, mean=mean, inv_std=inv_std)

    return pl.pallas_call(
        kernel,
        out_shape=jax.ShapeDtypeStruct((R, C), out_dtype),
        grid=grid,
        in_specs=[pl.BlockSpec((tile_rows, tile_cols), lambda i, j: (i, j))],
        out_specs=pl.BlockSpec((tile_rows, tile_cols), lambda i, j: (i, j)),
        compiler_params=pltpu.CompilerParams(
            dimension_semantics=("parallel", "parallel"),
            vmem_limit_bytes=vmem_limit,
        ),
        cost_estimate=pl.CostEstimate(
            flops=2 * R * C,
            transcendentals=0,
            bytes_accessed=R * C * per_elem,
        ),
    )(x2d)


class InputNorm:
    """JAX/Pallas port of the PyTorch InputNorm module (scalar mean/std)."""

    def __init__(self, mean=None, std=None):
        def _as_scalar(v):
            if v is None:
                return None
            if hasattr(v, "__iter__"):
                v = list(v)
                if len(v) != 1:
                    # TODO(synk): per-channel (length > 1) mean/std buffers are
                    # not implemented; the reference doctest only uses scalars.
                    raise NotImplementedError(
                        "only scalar / length-1 mean and std are supported")
                v = v[0]
            return float(v)

        self.mean = _as_scalar(mean)
        self.std = _as_scalar(std)

    def __call__(self, inputs):
        # Exact noop if both unspecified (matches PyTorch semantics).
        if self.mean is None and self.std is None:
            return inputs

        x = jnp.asarray(inputs)
        # PyTorch promotes against the float32 buffers.
        out_dtype = jnp.result_type(x.dtype, jnp.float32)
        n = x.size
        if n == 0:
            return x.astype(out_dtype)

        mean = 0.0 if self.mean is None else self.mean
        inv_std = 1.0 if self.std is None else 1.0 / self.std

        # Identity normalization: skip the HBM read+write pass entirely.
        if mean == 0.0 and inv_std == 1.0:
            return x.astype(out_dtype)

        orig_shape = x.shape
        # Choose a copy-free, lane-friendly 2D view of the contiguous array.
        if n % 128 == 0:
            x2d = x.reshape(-1, 128)       # perfectly lane-dense slab
        else:
            # Collapse the smallest trailing-dim suffix whose product >= 128
            # into the lane dim; only the final 128-lane stripe per row can be
            # masked, and HBM runs stay >= 128 elements.
            c = n
            suffix = 1
            for d in reversed(orig_shape):
                suffix *= d
                if suffix >= 128:
                    c = suffix
                    break
            x2d = x.reshape(-1, c)

        out2d = _scale_shift_2d(x2d, mean=mean, inv_std=inv_std,
                                out_dtype=out_dtype)
        return out2d.reshape(orig_shape)


if __name__ == "__main__":
    key = jax.random.PRNGKey(0)
    # NCHW input consistent with the module's doctest-style usage.
    x = jax.random.uniform(key, (2, 4, 16, 16), dtype=jnp.float32) * 100.0

    layer = InputNorm(mean=50.0, std=29.0)
    out = jax.block_until_ready(layer(x))

    ref = (x - 50.0) / 29.0
    assert out.shape == x.shape and out.dtype == x.dtype
    assert jnp.allclose(out, ref, atol=1e-5, rtol=1e-5)

    # Noop case: unspecified mean/std returns the input unchanged.
    noop = jax.block_until_ready(InputNorm()(x))
    assert jnp.all(noop == x)

    # Partial specification cases.
    p1 = jax.block_until_ready(InputNorm(mean=50.0)(x))
    assert jnp.allclose(p1, x - 50.0, atol=1e-5, rtol=1e-5)
    p2 = jax.block_until_ready(InputNorm(std=29.0)(x))
    assert jnp.allclose(p2, x / 29.0, atol=1e-5, rtol=1e-5)

    # Ragged case (element count not a multiple of 128, like the original
    # doctest shape (2, 3, 5, 7)): trailing dims collapse into a >=128-lane
    # row view -- no tiny-trailing-dim fallback, no wrapper pad/slice passes.
    x_odd = jax.random.uniform(jax.random.PRNGKey(1), (2, 3, 5, 7),
                               dtype=jnp.float32) * 100.0
    out_odd = jax.block_until_ready(layer(x_odd))
    assert out_odd.shape == x_odd.shape
    assert jnp.allclose(out_odd, (x_odd - 50.0) / 29.0, atol=1e-5, rtol=1e-5)

    # bf16 input promotes to f32 against the float32 buffers (exercises the
    # 16-row sublane-packing path).
    x_bf = (jax.random.uniform(jax.random.PRNGKey(2), (2, 4, 8, 32),
                               dtype=jnp.float32) * 100.0).astype(jnp.bfloat16)
    out_bf = jax.block_until_ready(layer(x_bf))
    assert out_bf.dtype == jnp.float32
    ref_bf = (x_bf.astype(jnp.float32) - 50.0) / 29.0
    assert jnp.allclose(out_bf, ref_bf, atol=1e-2, rtol=1e-2)

    # Identity short-circuit (mean=0, std=1) does not launch the kernel.
    ident = jax.block_until_ready(InputNorm(mean=0.0, std=1.0)(x))
    assert jnp.all(ident == x)

    print("KERNEL_OK")
</pallas_src>

<mosaic_0001>
module attributes {stable_mosaic.version = 11 : i64} {
  func.func @_scale_shift_kernel(%arg0: i32, %arg1: i32, %arg2: memref<16x128xf32, #tpu.memory_space<vmem>>, %arg3: memref<16x128xf32, #tpu.memory_space<vmem>>) attributes {dimension_semantics = [#tpu.dimension_semantics<parallel>, #tpu.dimension_semantics<parallel>], iteration_bounds = array<i64: 1, 1>, scalar_prefetch = 0 : i64, scratch_operands = 0 : i64, tpu.core_type = #tpu.core_type<tc>, window_params = [{transform_indices = @transform_0, window_bounds = array<i64: 16, 128>}, {transform_indices = @transform_1, window_bounds = array<i64: 16, 128>}]} {
    %c0 = arith.constant 0 : index
    %c0_0 = arith.constant 0 : index
    %0 = vector.load %arg2[%c0, %c0_0] : memref<16x128xf32, #tpu.memory_space<vmem>>, vector<16x128xf32>
    %cst = arith.constant 5.000000e+01 : f32
    %1 = vector.broadcast %cst : f32 to vector<16x128xf32>
    %2 = arith.subf %0, %1 : vector<16x128xf32>
    %cst_1 = arith.constant 0.0344827585 : f32
    %3 = vector.broadcast %cst_1 : f32 to vector<16x128xf32>
    %4 = arith.mulf %2, %3 : vector<16x128xf32>
    %c0_2 = arith.constant 0 : index
    %c0_3 = arith.constant 0 : index
    %5 = vector.load %arg3[%c0_2, %c0_3] : memref<16x128xf32, #tpu.memory_space<vmem>>, vector<16x128xf32>
    tpu.vector_store %arg3[%c0_2, %c0_3], %4 {strides = array<i32>} : memref<16x128xf32, #tpu.memory_space<vmem>>, vector<16x128xf32>,
    return
  }
  func.func @transform_0(%arg0: i32, %arg1: i32) -> (i32, i32) {
    %c0_i32 = arith.constant 0 : i32
    return %arg0, %arg1 : i32, i32
  }
  func.func @transform_1(%arg0: i32, %arg1: i32) -> (i32, i32) {
    %c0_i32 = arith.constant 0 : i32
    return %arg0, %arg1 : i32, i32
  }
}

</mosaic_0001>

<llo_original>
// kernel: tpu_custom_call.1
$region0: #{tpu_custom_call.1}
  #allocation0 [shape = 'u32[]', space=smem, size = 0x4, offset = 0x4, fixed_abs, tag = 'smem constant byte address 0x4 - core index']
  #allocation1 [shape = 'u32[144,128]{1,0:T(1,128)}', space=vmem, size = 0x12000, scoped, tag = 'internal scratch']
  %s0 = inlined_call_operand.hbm [shape: f32[16,128], index: 0, kind: input, shape index: {}]
  %s1 = inlined_call_operand.hbm [shape: f32[16,128], index: 1, kind: output, shape index: {}]
  %s2 = sld [smem:[#allocation0]]
  $region18: #{tpu_custom_call.1} parent=0
    _
  %s4 = ssub.s32 1, %s2
  %s5 = scalar_select 0, %s4, %s2
  $region1: #{tpu_custom_call.1} parent=0
    #allocation2 [shape = 'u8[8192]{0}', space=vmem, size = 0x2000, scoped, tag = 'input window, operand 0, single buffered']
    #allocation3 [shape = 's32[1]{0}', space=sflag, size = 0x4, scoped, tag = 'scoped memory for tpu_custom_call.1']
    #allocation4 [shape = 's32[1]{0}', space=sflag, size = 0x4, scoped, tag = 'scoped memory for tpu_custom_call.1']
    #allocation5 [shape = 'u8[8192]{0}', space=vmem, size = 0x2000, scoped, tag = 'output window, operand 0, single buffered']
    %6 = vsyncpa [#allocation3], 0
    %7 = vsyncpa [#allocation4], 0
    // Predicated region
    $region2: #{tpu_custom_call.1} parent=1 // pred_check
      _
    $region3: #{tpu_custom_call.1} parent=1 // pred_check_branch
      %9 = sbr.rel (0) target = $region5
    $region4: #{tpu_custom_call.1} parent=1 // pred_region
      %s11 = ssub.s32 256, 256
      %12 = vsyncadd [#allocation3], %s11
      %s13 = sshll.u32 [#allocation2], 4
      %s14 = int_to_ptr.vmem [resolvable:$true] %s13
      %19 = dma.hbm_to_vmem [thread:$0]  %s0, 256, %s14, [#allocation3], 128, 128, 8
    $region5: #{tpu_custom_call.1} parent=1 // pred_fallthru
      _
    // Predicated region
    $region6: #{tpu_custom_call.1} parent=1 // pred_check
      _
    $region7: #{tpu_custom_call.1} parent=1 // pred_check_branch
      %21 = sbr.rel (0) target = $region9
    $region8: #{tpu_custom_call.1} parent=1 // pred_region
      %22 = dma.done [#allocation3], 256
    $region9: #{tpu_custom_call.1} parent=1 // pred_fallthru
      _
    %v23 = vld [vmem:[#allocation2] sm:$0xff]
    %v24 = vld [vmem:[#allocation2 + $0x8] sm:$0xff]
    %v25 = vsub.f32 %v23, 50.0
    %v26 = vsub.f32 %v24, 50.0
    %v27 = vmul.f32 %v25, 0.03448276
    %v28 = vmul.f32 %v26, 0.03448276
    %29 = vst [vmem:[#allocation5] sm:$0xff] %v27
    %30 = vst [vmem:[#allocation5 + $0x8] sm:$0xff] %v28
    // Predicated region
    $region10: #{tpu_custom_call.1} parent=1 // pred_check
      _
    $region11: #{tpu_custom_call.1} parent=1 // pred_check_branch
      %32 = sbr.rel (0) target = $region13
    $region12: #{tpu_custom_call.1} parent=1 // pred_region
      %s34 = ssub.s32 256, 256
      %35 = vsyncadd [#allocation4], %s34
      %s36 = sshll.u32 [#allocation5], 4
      %s37 = int_to_ptr.vmem [resolvable:$true] %s36
      %42 = dma.vmem_to_hbm [thread:$0]  %s37, 256, %s1, [#allocation4], 128, 128, 8
    $region13: #{tpu_custom_call.1} parent=1 // pred_fallthru
      _
    // Predicated region
    $region14: #{tpu_custom_call.1} parent=1 // pred_check
      _
    $region15: #{tpu_custom_call.1} parent=1 // pred_check_branch
      %44 = sbr.rel (0) target = $region17
    $region16: #{tpu_custom_call.1} parent=1 // pred_region
      %45 = dma.done [#allocation4], 256
    $region17: #{tpu_custom_call.1} parent=1 // pred_fallthru
      _
    %46 = vsyncpa [#allocation3], 1
    %47 = vsyncpa [#allocation4], 1

</llo_original>
